<compile_context>
chip_gen: v5e
topology: v5e:2x2
jax: 0.10.0
libtpu: 0.0.40
codegen_flags: <defaults>
</compile_context>

<pallas_src>
import jax
import jax.numpy as jnp
from jax.experimental import pallas as pl
from jax.experimental.pallas import tpu as pltpu

HIDDEN = 128


def _round_up(n, m):
    return ((n + m - 1) // m) * m


def value_net_kernel(x_ref,
                     w1_ref, b1_ref,
                     w2_ref, b2_ref,
                     w3_ref, b3_ref,
                     w4_ref, b4_ref,
                     o_ref):
    # Layer 1: bf16 MXU operands, f32 accumulation; bias + ReLU in f32 (VPU).
    h = jnp.dot(x_ref[...].astype(jnp.bfloat16), w1_ref[...],
                preferred_element_type=jnp.float32)
    h = jnp.maximum(h + b1_ref[...], 0.0)
    # Layer 2
    h = jnp.dot(h.astype(jnp.bfloat16), w2_ref[...],
                preferred_element_type=jnp.float32)
    h = jnp.maximum(h + b2_ref[...], 0.0)
    # Layer 3
    h = jnp.dot(h.astype(jnp.bfloat16), w3_ref[...],
                preferred_element_type=jnp.float32)
    h = jnp.maximum(h + b3_ref[...], 0.0)
    # Output head: VPU multiply + lane reduction (w4 is a (1, 128) row) instead
    # of a wasteful 1-column MXU matmul.  Output block is (TILE_B, 1).
    o_ref[...] = (jnp.sum(h * w4_ref[...], axis=-1, keepdims=True)
                  + b4_ref[...])


def value_network_forward(x, params, tile_b=512):
    """x: (B, in_dim) float32. Returns (B, 1) float32 (same semantics as the
    PyTorch module: x @ W.T + b per layer, ReLU between hidden layers)."""
    B, in_dim = x.shape

    # Tile over batch; keep the tile a multiple of 8 sublanes and pad the batch
    # so the grid divides evenly (padded rows are sliced off at the end).
    tile_b = min(tile_b, _round_up(max(B, 1), 8))
    b_pad = _round_up(B, tile_b)
    if b_pad != B:
        x = jnp.pad(x, ((0, b_pad - B), (0, 0)))
    grid = (b_pad // tile_b,)

    def resident(shape):
        # Full-array block whose index never changes -> fetched once, stays in VMEM.
        return pl.BlockSpec(shape, lambda i: (0, 0))

    flops = 2 * b_pad * (in_dim * HIDDEN + 2 * HIDDEN * HIDDEN + HIDDEN)
    bytes_accessed = (
        int(x.size) * x.dtype.itemsize
        + sum(int(p.size) * p.dtype.itemsize for p in params.values())
        + b_pad * 4
    )

    out = pl.pallas_call(
        value_net_kernel,
        out_shape=jax.ShapeDtypeStruct((b_pad, 1), jnp.float32),
        grid=grid,
        in_specs=[
            pl.BlockSpec((tile_b, in_dim), lambda i: (i, 0)),   # x tile
            resident(params["w1"].shape), resident(params["b1"].shape),
            resident(params["w2"].shape), resident(params["b2"].shape),
            resident(params["w3"].shape), resident(params["b3"].shape),
            resident(params["w4"].shape), resident(params["b4"].shape),
        ],
        out_specs=pl.BlockSpec((tile_b, 1), lambda i: (i, 0)),
        compiler_params=pltpu.CompilerParams(
            dimension_semantics=("parallel",)),
        cost_estimate=pl.CostEstimate(
            flops=flops, transcendentals=0, bytes_accessed=bytes_accessed),
    )(
        x,
        params["w1"], params["b1"],
        params["w2"], params["b2"],
        params["w3"], params["b3"],
        params["w4"], params["b4"],
    )
    return out[:B]


def init_params(key, in_dim):
    """PyTorch nn.Linear default init: U(-1/sqrt(fan_in), 1/sqrt(fan_in)).
    Weights stored as (fan_in, fan_out); w1..w3 cast to bf16 for the MXU path,
    w4 kept as a (1, 128) f32 row for the VPU head, biases f32."""
    dims = [(in_dim, HIDDEN), (HIDDEN, HIDDEN), (HIDDEN, HIDDEN), (HIDDEN, 1)]
    params = {}
    for i, (fi, fo) in enumerate(dims, start=1):
        key, kw, kb = jax.random.split(key, 3)
        bound = 1.0 / jnp.sqrt(jnp.float32(fi))
        params[f"w{i}"] = jax.random.uniform(kw, (fi, fo), jnp.float32, -bound, bound)
        params[f"b{i}"] = jax.random.uniform(kb, (1, fo), jnp.float32, -bound, bound)
    for i in (1, 2, 3):
        params[f"w{i}"] = params[f"w{i}"].astype(jnp.bfloat16)
    params["w4"] = params["w4"].reshape(1, HIDDEN)   # row layout for VPU head
    params["b4"] = params["b4"].reshape(1, 1)
    return params


def reference_forward(x, params):
    """Pure-JAX reference using the same bf16-operand / f32-accumulate math."""
    def dense(h, w, b):
        return jnp.dot(h.astype(w.dtype), w,
                       preferred_element_type=jnp.float32) + b
    h = jnp.maximum(dense(x, params["w1"], params["b1"]), 0.0)
    h = jnp.maximum(dense(h, params["w2"], params["b2"]), 0.0)
    h = jnp.maximum(dense(h, params["w3"], params["b3"]), 0.0)
    return jnp.sum(h * params["w4"], axis=-1, keepdims=True) + params["b4"]


if __name__ == "__main__":
    key = jax.random.PRNGKey(0)
    batch, in_dim = 2, 4  # e.g. CartPole observation dim
    key, kx = jax.random.split(key)
    x = jax.random.normal(kx, (batch, in_dim), jnp.float32)

    params = init_params(key, in_dim)

    out = value_network_forward(x, params)
    out = jax.block_until_ready(out)

    ref = reference_forward(x, params)
    assert out.shape == (batch, 1)
    assert jnp.allclose(out, ref, atol=1e-3, rtol=1e-3), "mismatch vs reference"

    print("KERNEL_OK")
</pallas_src>

<mosaic_0001>
module attributes {stable_mosaic.version = 11 : i64} {
  func.func @value_net_kernel(%arg0: i32, %arg1: memref<8x4xf32, #tpu.memory_space<vmem>>, %arg2: memref<4x128xbf16, #tpu.memory_space<vmem>>, %arg3: memref<1x128xf32, #tpu.memory_space<vmem>>, %arg4: memref<128x128xbf16, #tpu.memory_space<vmem>>, %arg5: memref<1x128xf32, #tpu.memory_space<vmem>>, %arg6: memref<128x128xbf16, #tpu.memory_space<vmem>>, %arg7: memref<1x128xf32, #tpu.memory_space<vmem>>, %arg8: memref<1x128xf32, #tpu.memory_space<vmem>>, %arg9: memref<1x1xf32, #tpu.memory_space<vmem>>, %arg10: memref<8x1xf32, #tpu.memory_space<vmem>>) attributes {dimension_semantics = [#tpu.dimension_semantics<parallel>], iteration_bounds = array<i64: 1>, scalar_prefetch = 0 : i64, scratch_operands = 0 : i64, tpu.core_type = #tpu.core_type<tc>, window_params = [{transform_indices = @transform_0, window_bounds = array<i64: 8, 4>}, {pipeline_mode = #tpu.pipeline_mode<synchronous>, transform_indices = @transform_1, window_bounds = array<i64: 4, 128>}, {pipeline_mode = #tpu.pipeline_mode<synchronous>, transform_indices = @transform_2, window_bounds = array<i64: 1, 128>}, {pipeline_mode = #tpu.pipeline_mode<synchronous>, transform_indices = @transform_3, window_bounds = array<i64: 128, 128>}, {pipeline_mode = #tpu.pipeline_mode<synchronous>, transform_indices = @transform_4, window_bounds = array<i64: 1, 128>}, {pipeline_mode = #tpu.pipeline_mode<synchronous>, transform_indices = @transform_5, window_bounds = array<i64: 128, 128>}, {pipeline_mode = #tpu.pipeline_mode<synchronous>, transform_indices = @transform_6, window_bounds = array<i64: 1, 128>}, {pipeline_mode = #tpu.pipeline_mode<synchronous>, transform_indices = @transform_7, window_bounds = array<i64: 1, 128>}, {pipeline_mode = #tpu.pipeline_mode<synchronous>, transform_indices = @transform_8, window_bounds = array<i64: 1, 1>}, {transform_indices = @transform_9, window_bounds = array<i64: 8, 1>}]} {
    %c0 = arith.constant 0 : index
    %c0_0 = arith.constant 0 : index
    %0 = vector.load %arg1[%c0, %c0_0] : memref<8x4xf32, #tpu.memory_space<vmem>>, vector<8x4xf32>
    %1 = arith.truncf %0 : vector<8x4xf32> to vector<8x4xbf16>
    %c0_1 = arith.constant 0 : index
    %c0_2 = arith.constant 0 : index
    %2 = vector.load %arg2[%c0_1, %c0_2] : memref<4x128xbf16, #tpu.memory_space<vmem>>, vector<4x128xbf16>
    %cst = arith.constant dense<0.000000e+00> : vector<8x128xf32>
    %3 = tpu.matmul %1, %2, %cst {dimension_numbers = #tpu.dot_dimension_numbers<[1], [0], [0], [1], [0, 0, 1, 1], [], []>} : vector<8x4xbf16>, vector<4x128xbf16>, vector<8x128xf32> -> vector<8x128xf32>
    %c0_3 = arith.constant 0 : index
    %c0_4 = arith.constant 0 : index
    %4 = vector.load %arg3[%c0_3, %c0_4] : memref<1x128xf32, #tpu.memory_space<vmem>>, vector<1x128xf32>
    %5 = vector.broadcast %4 : vector<1x128xf32> to vector<8x128xf32>
    %6 = arith.addf %3, %5 : vector<8x128xf32>
    %cst_5 = arith.constant 0.000000e+00 : f32
    %7 = vector.broadcast %cst_5 : f32 to vector<8x128xf32>
    %8 = arith.maximumf %6, %7 : vector<8x128xf32>
    %9 = arith.truncf %8 : vector<8x128xf32> to vector<8x128xbf16>
    %c0_6 = arith.constant 0 : index
    %c0_7 = arith.constant 0 : index
    %10 = vector.load %arg4[%c0_6, %c0_7] : memref<128x128xbf16, #tpu.memory_space<vmem>>, vector<128x128xbf16>
    %cst_8 = arith.constant dense<0.000000e+00> : vector<8x128xf32>
    %11 = tpu.matmul %9, %10, %cst_8 {dimension_numbers = #tpu.dot_dimension_numbers<[1], [0], [0], [1], [0, 0, 1, 1], [], []>} : vector<8x128xbf16>, vector<128x128xbf16>, vector<8x128xf32> -> vector<8x128xf32>
    %c0_9 = arith.constant 0 : index
    %c0_10 = arith.constant 0 : index
    %12 = vector.load %arg5[%c0_9, %c0_10] : memref<1x128xf32, #tpu.memory_space<vmem>>, vector<1x128xf32>
    %13 = vector.broadcast %12 : vector<1x128xf32> to vector<8x128xf32>
    %14 = arith.addf %11, %13 : vector<8x128xf32>
    %cst_11 = arith.constant 0.000000e+00 : f32
    %15 = vector.broadcast %cst_11 : f32 to vector<8x128xf32>
    %16 = arith.maximumf %14, %15 : vector<8x128xf32>
    %17 = arith.truncf %16 : vector<8x128xf32> to vector<8x128xbf16>
    %c0_12 = arith.constant 0 : index
    %c0_13 = arith.constant 0 : index
    %18 = vector.load %arg6[%c0_12, %c0_13] : memref<128x128xbf16, #tpu.memory_space<vmem>>, vector<128x128xbf16>
    %cst_14 = arith.constant dense<0.000000e+00> : vector<8x128xf32>
    %19 = tpu.matmul %17, %18, %cst_14 {dimension_numbers = #tpu.dot_dimension_numbers<[1], [0], [0], [1], [0, 0, 1, 1], [], []>} : vector<8x128xbf16>, vector<128x128xbf16>, vector<8x128xf32> -> vector<8x128xf32>
    %c0_15 = arith.constant 0 : index
    %c0_16 = arith.constant 0 : index
    %20 = vector.load %arg7[%c0_15, %c0_16] : memref<1x128xf32, #tpu.memory_space<vmem>>, vector<1x128xf32>
    %21 = vector.broadcast %20 : vector<1x128xf32> to vector<8x128xf32>
    %22 = arith.addf %19, %21 : vector<8x128xf32>
    %cst_17 = arith.constant 0.000000e+00 : f32
    %23 = vector.broadcast %cst_17 : f32 to vector<8x128xf32>
    %24 = arith.maximumf %22, %23 : vector<8x128xf32>
    %c0_18 = arith.constant 0 : index
    %c0_19 = arith.constant 0 : index
    %25 = vector.load %arg8[%c0_18, %c0_19] : memref<1x128xf32, #tpu.memory_space<vmem>>, vector<1x128xf32>
    %26 = vector.broadcast %25 : vector<1x128xf32> to vector<8x128xf32>
    %27 = arith.mulf %24, %26 : vector<8x128xf32>
    %cst_20 = arith.constant dense<0.000000e+00> : vector<8xf32>
    %28 = vector.multi_reduction <add>, %27, %cst_20 [1] : vector<8x128xf32> to vector<8xf32>
    %29 = vector.shape_cast %28 : vector<8xf32> to vector<8x1xf32>
    %c0_21 = arith.constant 0 : index
    %c0_22 = arith.constant 0 : index
    %30 = vector.load %arg9[%c0_21, %c0_22] : memref<1x1xf32, #tpu.memory_space<vmem>>, vector<1x1xf32>
    %31 = vector.broadcast %30 : vector<1x1xf32> to vector<8x1xf32>
    %32 = arith.addf %29, %31 : vector<8x1xf32>
    %c0_23 = arith.constant 0 : index
    %c0_24 = arith.constant 0 : index
    %33 = vector.load %arg10[%c0_23, %c0_24] : memref<8x1xf32, #tpu.memory_space<vmem>>, vector<8x1xf32>
    tpu.vector_store %arg10[%c0_23, %c0_24], %32 {strides = array<i32>} : memref<8x1xf32, #tpu.memory_space<vmem>>, vector<8x1xf32>,
    return
  }
  func.func @transform_0(%arg0: i32) -> (i32, i32) {
    %c0_i32 = arith.constant 0 : i32
    %c0_i32_0 = arith.constant 0 : i32
    return %arg0, %c0_i32 : i32, i32
  }
  func.func @transform_1(%arg0: i32) -> (i32, i32) {
    %c0_i32 = arith.constant 0 : i32
    %c0_i32_0 = arith.constant 0 : i32
    %c0_i32_1 = arith.constant 0 : i32
    return %c0_i32, %c0_i32_0 : i32, i32
  }
  func.func @transform_2(%arg0: i32) -> (i32, i32) {
    %c0_i32 = arith.constant 0 : i32
    %c0_i32_0 = arith.constant 0 : i32
    %c0_i32_1 = arith.constant 0 : i32
    return %c0_i32, %c0_i32_0 : i32, i32
  }
  func.func @transform_3(%arg0: i32) -> (i32, i32) {
    %c0_i32 = arith.constant 0 : i32
    %c0_i32_0 = arith.constant 0 : i32
    %c0_i32_1 = arith.constant 0 : i32
    return %c0_i32, %c0_i32_0 : i32, i32
  }
  func.func @transform_4(%arg0: i32) -> (i32, i32) {
    %c0_i32 = arith.constant 0 : i32
    %c0_i32_0 = arith.constant 0 : i32
    %c0_i32_1 = arith.constant 0 : i32
    return %c0_i32, %c0_i32_0 : i32, i32
  }
  func.func @transform_5(%arg0: i32) -> (i32, i32) {
    %c0_i32 = arith.constant 0 : i32
    %c0_i32_0 = arith.constant 0 : i32
    %c0_i32_1 = arith.constant 0 : i32
    return %c0_i32, %c0_i32_0 : i32, i32
  }
  func.func @transform_6(%arg0: i32) -> (i32, i32) {
    %c0_i32 = arith.constant 0 : i32
    %c0_i32_0 = arith.constant 0 : i32
    %c0_i32_1 = arith.constant 0 : i32
    return %c0_i32, %c0_i32_0 : i32, i32
  }
  func.func @transform_7(%arg0: i32) -> (i32, i32) {
    %c0_i32 = arith.constant 0 : i32
    %c0_i32_0 = arith.constant 0 : i32
    %c0_i32_1 = arith.constant 0 : i32
    return %c0_i32, %c0_i32_0 : i32, i32
  }
  func.func @transform_8(%arg0: i32) -> (i32, i32) {
    %c0_i32 = arith.constant 0 : i32
    %c0_i32_0 = arith.constant 0 : i32
    %c0_i32_1 = arith.constant 0 : i32
    return %c0_i32, %c0_i32_0 : i32, i32
  }
  func.func @transform_9(%arg0: i32) -> (i32, i32) {
    %c0_i32 = arith.constant 0 : i32
    %c0_i32_0 = arith.constant 0 : i32
    return %arg0, %c0_i32 : i32, i32
  }
}

</mosaic_0001>

<llo_original>
// kernel: tpu_custom_call.1
$region0: #{tpu_custom_call.1}
  #allocation0 [shape = 'u32[]', space=smem, size = 0x4, offset = 0x4, fixed_abs, tag = 'smem constant byte address 0x4 - core index']
  #allocation1 [shape = 'u32[72,128]{1,0:T(1,128)}', space=vmem, size = 0x9000, scoped, tag = 'internal scratch']
  #allocation2 [shape = 'f32[1,1]{1,0:T(1,128)S(1)}', space=vmem, size = 0x200, scoped, tag = 'scoped memory for tpu_custom_call.1']
  %s0 = inlined_call_operand.vmem [shape: f32[8,4], index: 0, kind: input, shape index: {}]
  %s1 = inlined_call_operand.vmem [shape: bf16[4,128], index: 1, kind: input, shape index: {}]
  %s2 = inlined_call_operand.vmem [shape: f32[1,128], index: 2, kind: input, shape index: {}]
  %s3 = inlined_call_operand.hbm [shape: bf16[128,128], index: 3, kind: input, shape index: {}]
  %s4 = inlined_call_operand.vmem [shape: f32[1,128], index: 4, kind: input, shape index: {}]
  %s5 = inlined_call_operand.hbm [shape: bf16[128,128], index: 5, kind: input, shape index: {}]
  %s6 = inlined_call_operand.vmem [shape: f32[1,128], index: 6, kind: input, shape index: {}]
  %s7 = inlined_call_operand.vmem [shape: f32[1,128], index: 7, kind: input, shape index: {}]
  %s8 = inlined_call_operand.<no memory space> [shape: f32[1,1], index: 8, kind: input, shape index: {}]
  %s9 = inlined_call_operand.vmem [shape: f32[8,1], index: 9, kind: output, shape index: {}]
  %s10 = sld [smem:[#allocation0]]
  $region54: #{tpu_custom_call.1} parent=0
    _
  %s12 = ssub.s32 1, %s10
  %s13 = scalar_select 0, %s12, %s10
  %v14 = vstv %s8
  %15 = vst [vmem:[#allocation2] sm:$0x1] %v14
  $region1: #{tpu_custom_call.1} parent=0
    #allocation3 [shape = 'u8[32768]{0}', space=vmem, size = 0x8000, scoped, tag = 'input window, operand 3, single buffered']
    #allocation4 [shape = 's32[1]{0}', space=sflag, size = 0x4, scoped, tag = 'scoped memory for tpu_custom_call.1']
    #allocation5 [shape = 'u8[32768]{0}', space=vmem, size = 0x8000, scoped, tag = 'input window, operand 5, single buffered']
    #allocation6 [shape = 's32[1]{0}', space=sflag, size = 0x4, scoped, tag = 'scoped memory for tpu_custom_call.1']
    %16 = vsyncpa [#allocation4], 0
    %17 = vsyncpa [#allocation6], 0
    // Predicated region
    $region2: #{tpu_custom_call.1} parent=1 // pred_check
      _
    $region3: #{tpu_custom_call.1} parent=1 // pred_check_branch
      %19 = sbr.rel (0) target = $region5
    $region4: #{tpu_custom_call.1} parent=1 // pred_region
      _
    $region5: #{tpu_custom_call.1} parent=1 // pred_fallthru
      _
    // Predicated region
    $region6: #{tpu_custom_call.1} parent=1 // pred_check
      _
    $region7: #{tpu_custom_call.1} parent=1 // pred_check_branch
      %21 = sbr.rel (0) target = $region9
    $region8: #{tpu_custom_call.1} parent=1 // pred_region
      _
    $region9: #{tpu_custom_call.1} parent=1 // pred_fallthru
      _
    // Predicated region
    $region10: #{tpu_custom_call.1} parent=1 // pred_check
      _
    $region11: #{tpu_custom_call.1} parent=1 // pred_check_branch
      %23 = sbr.rel (0) target = $region13
    $region12: #{tpu_custom_call.1} parent=1 // pred_region
      _
    $region13: #{tpu_custom_call.1} parent=1 // pred_fallthru
      _
    // Predicated region
    $region14: #{tpu_custom_call.1} parent=1 // pred_check
      _
    $region15: #{tpu_custom_call.1} parent=1 // pred_check_branch
      %25 = sbr.rel (0) target = $region17
    $region16: #{tpu_custom_call.1} parent=1 // pred_region
      %27 = vsyncadd [#allocation4], 0
      %s28 = sshll.u32 %s3, 4
      %s29 = int_to_ptr.hbm [resolvable:$true] %s28
      %s30 = sshll.u32 [#allocation3], 4
      %s31 = int_to_ptr.vmem [resolvable:$true] %s30
      %36 = dma.hbm_to_vmem [thread:$0]  %s29, 1024, %s31, [#allocation4], 64, 64, 4
    $region17: #{tpu_custom_call.1} parent=1 // pred_fallthru
      _
    // Predicated region
    $region18: #{tpu_custom_call.1} parent=1 // pred_check
      _
    $region19: #{tpu_custom_call.1} parent=1 // pred_check_branch
      %38 = sbr.rel (0) target = $region21
    $region20: #{tpu_custom_call.1} parent=1 // pred_region
      _
    $region21: #{tpu_custom_call.1} parent=1 // pred_fallthru
      _
    // Predicated region
    $region22: #{tpu_custom_call.1} parent=1 // pred_check
      _
    $region23: #{tpu_custom_call.1} parent=1 // pred_check_branch
      %40 = sbr.rel (0) target = $region25
    $region24: #{tpu_custom_call.1} parent=1 // pred_region
      %42 = vsyncadd [#allocation6], 0
      %s43 = sshll.u32 %s5, 4
      %s44 = int_to_ptr.hbm [resolvable:$true] %s43
      %s45 = sshll.u32 [#allocation5], 4
      %s46 = int_to_ptr.vmem [resolvable:$true] %s45
      %51 = dma.hbm_to_vmem [thread:$0]  %s44, 1024, %s46, [#allocation6], 64, 64, 4
    $region25: #{tpu_custom_call.1} parent=1 // pred_fallthru
      _
    // Predicated region
    $region26: #{tpu_custom_call.1} parent=1 // pred_check
      _
    $region27: #{tpu_custom_call.1} parent=1 // pred_check_branch
      %53 = sbr.rel (0) target = $region29
    $region28: #{tpu_custom_call.1} parent=1 // pred_region
      _
    $region29: #{tpu_custom_call.1} parent=1 // pred_fallthru
      _
    // Predicated region
    $region30: #{tpu_custom_call.1} parent=1 // pred_check
      _
    $region31: #{tpu_custom_call.1} parent=1 // pred_check_branch
      %55 = sbr.rel (0) target = $region33
    $region32: #{tpu_custom_call.1} parent=1 // pred_region
      _
    $region33: #{tpu_custom_call.1} parent=1 // pred_fallthru
      _
    // Predicated region
    $region34: #{tpu_custom_call.1} parent=1 // pred_check
      _
    $region35: #{tpu_custom_call.1} parent=1 // pred_check_branch
      %57 = sbr.rel (0) target = $region37
    $region36: #{tpu_custom_call.1} parent=1 // pred_region
      _
    $region37: #{tpu_custom_call.1} parent=1 // pred_fallthru
      _
    // Predicated region
    $region38: #{tpu_custom_call.1} parent=1 // pred_check
      _
    $region39: #{tpu_custom_call.1} parent=1 // pred_check_branch
      %59 = sbr.rel (0) target = $region41
    $region40: #{tpu_custom_call.1} parent=1 // pred_region
      %61 = dma.done [#allocation4], 1024
    $region41: #{tpu_custom_call.1} parent=1 // pred_fallthru
      _
    // Predicated region
    $region42: #{tpu_custom_call.1} parent=1 // pred_check
      _
    $region43: #{tpu_custom_call.1} parent=1 // pred_check_branch
      %63 = sbr.rel (0) target = $region45
    $region44: #{tpu_custom_call.1} parent=1 // pred_region
      %65 = dma.done [#allocation6], 1024
    $region45: #{tpu_custom_call.1} parent=1 // pred_fallthru
      _
    %v67 = vld [vmem:[%s0] sm:$0xff]
    %v68 = vpack.c.bf16 %v67, %v67
    %v69 = vld [vmem:[%s1] sm:$0x3]
    %v70 = vld [vmem:[%s2] sm:$0x1]
    %v72 = vperm.slane %v70, 0
    %vm74 = vcmask 31744
    %v76 = vsel %vm74, %v68, 0
    %vm78 = vcmask 1041408
    %v80 = vsel %vm78, %v69, 0
    %82 = vmatpush.bf16.msra.mxu0 0
    %83 = vmatpush.bf16.msra.mxu0 0
    %84 = vmatpush.bf16.msra.mxu0 0
    %85 = vmatpush.bf16.msra.mxu0 0
    %86 = vmatpush.bf16.msra.mxu0 0
    %87 = vmatpush.bf16.msra.mxu0 0
    %88 = vmatpush.bf16.msra.mxu0 0
    %89 = vmatpush.bf16.msra.mxu0 %v80
    %90 = vmatmul.bf16.gmra.mxu0 %v76
    %v91 = vpop.f32.mrf.mxu0
    %v92 = vadd.f32 %v72, %v91
    %v93 = vpop.f32.mrf.mxu0
    %94 = vdwg.mxu0
    %v95 = vmax.f32 %v92, 0.0
    %v96 = vpack.c.bf16 %v95, %v95
    %v97 = vld [vmem:[#allocation3] sm:$0xf]
    %v98 = vld [vmem:[#allocation3 + $0x4] sm:$0xf]
    %v99 = vld [vmem:[#allocation3 + $0x8] sm:$0xf]
    %v100 = vld [vmem:[#allocation3 + $0xc] sm:$0xf]
    %v101 = vld [vmem:[#allocation3 + $0x10] sm:$0xf]
    %v102 = vld [vmem:[#allocation3 + $0x14] sm:$0xf]
    %v103 = vld [vmem:[#allocation3 + $0x18] sm:$0xf]
    %v104 = vld [vmem:[#allocation3 + $0x1c] sm:$0xf]
    %v105 = vld [vmem:[#allocation3 + $0x20] sm:$0xf]
    %v106 = vld [vmem:[#allocation3 + $0x24] sm:$0xf]
    %v107 = vld [vmem:[#allocation3 + $0x28] sm:$0xf]
    %v108 = vld [vmem:[#allocation3 + $0x2c] sm:$0xf]
    %v109 = vld [vmem:[#allocation3 + $0x30] sm:$0xf]
    %v110 = vld [vmem:[#allocation3 + $0x34] sm:$0xf]
    %v111 = vld [vmem:[#allocation3 + $0x38] sm:$0xf]
    %v112 = vld [vmem:[#allocation3 + $0x3c] sm:$0xf]
    %v113 = vld [vmem:[%s4] sm:$0x1]
    %v115 = vperm.slane %v113, 0
    %v133 = vunpack.c.l.b16 %v97
    %v134 = vunpack.c.l.b16 %v98
    %v135 = vunpack.c.l.b16 %v99
    %v136 = vunpack.c.l.b16 %v100
    %v137 = vunpack.c.l.b16 %v101
    %v138 = vunpack.c.l.b16 %v102
    %v139 = vunpack.c.l.b16 %v103
    %v140 = vunpack.c.l.b16 %v104
    %v141 = vunpack.c.l.b16 %v105
    %v142 = vunpack.c.l.b16 %v106
    %v143 = vunpack.c.l.b16 %v107
    %v144 = vunpack.c.l.b16 %v108
    %v145 = vunpack.c.l.b16 %v109
    %v146 = vunpack.c.l.b16 %v110
    %v147 = vunpack.c.l.b16 %v111
    %v148 = vunpack.c.l.b16 %v112
    %v149 = vpack.c.b16 %v134, %v133
    %v150 = vpack.c.b16 %v136, %v135
    %v151 = vpack.c.b16 %v138, %v137
    %v152 = vpack.c.b16 %v140, %v139
    %v153 = vpack.c.b16 %v142, %v141
    %v154 = vpack.c.b16 %v144, %v143
    %v155 = vpack.c.b16 %v146, %v145
    %v156 = vpack.c.b16 %v148, %v147
    %165 = vmatpush.bf16.msra.mxu0 %v156
    %166 = vmatpush.bf16.msra.mxu0 %v155
    %167 = vmatpush.bf16.msra.mxu0 %v154
    %168 = vmatpush.bf16.msra.mxu0 %v153
    %169 = vmatpush.bf16.msra.mxu0 %v152
    %170 = vmatpush.bf16.msra.mxu0 %v151
    %171 = vmatpush.bf16.msra.mxu0 %v150
    %172 = vmatpush.bf16.msra.mxu0 %v149
    %173 = vmatmul.bf16.gmra.mxu0 %v96
    %v174 = vpop.f32.mrf.mxu0
    %v175 = vadd.f32 %v115, %v174
    %v176 = vpop.f32.mrf.mxu0
    %177 = vdwg.mxu0
    %v178 = vmax.f32 %v175, 0.0
    %v179 = vpack.c.bf16 %v178, %v178
    %v180 = vld [vmem:[#allocation5] sm:$0xf]
    %v181 = vld [vmem:[#allocation5 + $0x4] sm:$0xf]
    %v182 = vld [vmem:[#allocation5 + $0x8] sm:$0xf]
    %v183 = vld [vmem:[#allocation5 + $0xc] sm:$0xf]
    %v184 = vld [vmem:[#allocation5 + $0x10] sm:$0xf]
    %v185 = vld [vmem:[#allocation5 + $0x14] sm:$0xf]
    %v186 = vld [vmem:[#allocation5 + $0x18] sm:$0xf]
    %v187 = vld [vmem:[#allocation5 + $0x1c] sm:$0xf]
    %v188 = vld [vmem:[#allocation5 + $0x20] sm:$0xf]
    %v189 = vld [vmem:[#allocation5 + $0x24] sm:$0xf]
    %v190 = vld [vmem:[#allocation5 + $0x28] sm:$0xf]
    %v191 = vld [vmem:[#allocation5 + $0x2c] sm:$0xf]
    %v192 = vld [vmem:[#allocation5 + $0x30] sm:$0xf]
    %v193 = vld [vmem:[#allocation5 + $0x34] sm:$0xf]
    %v194 = vld [vmem:[#allocation5 + $0x38] sm:$0xf]
    %v195 = vld [vmem:[#allocation5 + $0x3c] sm:$0xf]
    %v196 = vld [vmem:[%s6] sm:$0x1]
    %v198 = vperm.slane %v196, 0
    %v216 = vunpack.c.l.b16 %v180
    %v217 = vunpack.c.l.b16 %v181
    %v218 = vunpack.c.l.b16 %v182
    %v219 = vunpack.c.l.b16 %v183
    %v220 = vunpack.c.l.b16 %v184
    %v221 = vunpack.c.l.b16 %v185
    %v222 = vunpack.c.l.b16 %v186
    %v223 = vunpack.c.l.b16 %v187
    %v224 = vunpack.c.l.b16 %v188
    %v225 = vunpack.c.l.b16 %v189
    %v226 = vunpack.c.l.b16 %v190
    %v227 = vunpack.c.l.b16 %v191
    %v228 = vunpack.c.l.b16 %v192
    %v229 = vunpack.c.l.b16 %v193
    %v230 = vunpack.c.l.b16 %v194
    %v231 = vunpack.c.l.b16 %v195
    %v232 = vpack.c.b16 %v217, %v216
    %v233 = vpack.c.b16 %v219, %v218
    %v234 = vpack.c.b16 %v221, %v220
    %v235 = vpack.c.b16 %v223, %v222
    %v236 = vpack.c.b16 %v225, %v224
    %v237 = vpack.c.b16 %v227, %v226
    %v238 = vpack.c.b16 %v229, %v228
    %v239 = vpack.c.b16 %v231, %v230
    %248 = vmatpush.bf16.msra.mxu0 %v239
    %249 = vmatpush.bf16.msra.mxu0 %v238
    %250 = vmatpush.bf16.msra.mxu0 %v237
    %251 = vmatpush.bf16.msra.mxu0 %v236
    %252 = vmatpush.bf16.msra.mxu0 %v235
    %253 = vmatpush.bf16.msra.mxu0 %v234
    %254 = vmatpush.bf16.msra.mxu0 %v233
    %255 = vmatpush.bf16.msra.mxu0 %v232
    %256 = vmatmul.bf16.gmra.mxu0 %v179
    %v257 = vpop.f32.mrf.mxu0
    %v258 = vadd.f32 %v198, %v257
    %v259 = vpop.f32.mrf.mxu0
    %260 = vdwg.mxu0
    %v261 = vmax.f32 %v258, 0.0
    %v262 = vld [vmem:[%s7] sm:$0x1]
    %v264 = vperm.slane %v262, 0
    %v266 = vmul.f32 %v261, %v264
    %267 = vadd.xlane.f32.xlu0 %v266
    %v268 = vpop.xlane.xlu0 %267
    %v269 = vld [vmem:[#allocation2] sm:$0x1]
    %v271 = vperm.slane %v269, 0
    %v273 = vadd.f32 %v268, %v271
    %vm274 = vcmask 7168
    %275 = vst.msk [vmem:[%s9] sm:$0xff] %vm274, %v273
    // Predicated region
    $region46: #{tpu_custom_call.1} parent=1 // pred_check
      _
    $region47: #{tpu_custom_call.1} parent=1 // pred_check_branch
      %277 = sbr.rel (0) target = $region49
    $region48: #{tpu_custom_call.1} parent=1 // pred_region
      _
    $region49: #{tpu_custom_call.1} parent=1 // pred_fallthru
      _
    // Predicated region
    $region50: #{tpu_custom_call.1} parent=1 // pred_check
      _
    $region51: #{tpu_custom_call.1} parent=1 // pred_check_branch
      %279 = sbr.rel (0) target = $region53
    $region52: #{tpu_custom_call.1} parent=1 // pred_region
      _
    $region53: #{tpu_custom_call.1} parent=1 // pred_fallthru
      _
    %280 = vsyncpa [#allocation4], 1
    %281 = vsyncpa [#allocation6], 1

</llo_original>
